<compile_context>
chip_gen: v5e
topology: v5e:2x2
jax: 0.10.0
libtpu: 0.0.40
codegen_flags: <defaults>
</compile_context>

<pallas_src>
import functools

import jax
import jax.numpy as jnp
from jax import lax
from jax.experimental import pallas as pl
from jax.experimental.pallas import tpu as pltpu


# ----------------------------------------------------------------------------
# Pallas kernel: full MLP forward on one batch tile, chunked along lanes.
#   x_ref : (2, T)        input features, batch on lanes (normalization folded)
#   p_ref : (H_pad, 128)  packed parameters:
#             cols [0, H)       : W2 (H x H, zero-padded)
#             col  H            : W1[:, 0] (x-feature column, scaled)
#             col  H + 1        : W1[:, 1] (t-feature column, scaled)
#             col  H + 2        : b1 (normalization-folded)
#             col  H + 3        : b2
#             col  H + 4        : W3^T
#             col  H + 5, row 0 : b3
#   o_ref : (1, T)
# ----------------------------------------------------------------------------
def pinn_forward_kernel(x_ref, p_ref, o_ref, *, chunk, n_chunks):
    p = p_ref[...]                                   # (H_pad, 128), VMEM-resident
    h = p.shape[0]

    # Hoisted static slices (once per grid step, outside the chunk loop).
    w2 = p[:, 0:h]                                   # (H, H)
    w1x = p[:, h:h + 1]                              # (H, 1)
    w1t = p[:, h + 1:h + 2]                          # (H, 1)
    b1 = p[:, h + 2:h + 3]                           # (H, 1)
    b2 = p[:, h + 3:h + 4]                           # (H, 1)
    w3 = p[:, h + 4:h + 5]                           # (H, 1)
    b3 = p[0:1, h + 5:h + 6]                         # (1, 1)

    def body(c, carry):
        off = pl.multiple_of(c * chunk, chunk)
        x = x_ref[:, pl.ds(off, chunk)]              # (2, C)

        # Layer 1 (K = 2): two broadcast FMAs on the VPU — skip the MXU.
        z1 = w1x * x[0:1, :] + w1t * x[1:2, :] + b1  # (H, C)
        a1 = jnp.tanh(z1)                            # lane-dense tanh (EUP)

        # Layer 2 (H x H): the only layer worth the MXU.
        z2 = jnp.dot(w2, a1, preferred_element_type=jnp.float32) + b2
        a2 = jnp.tanh(z2)                            # (H, C)

        # Layer 3 (out = 1): multiply + sublane reduce — skip the MXU.
        out = jnp.sum(w3 * a2, axis=0, keepdims=True) + b3
        o_ref[:, pl.ds(off, chunk)] = out.astype(o_ref.dtype)
        return carry

    lax.fori_loop(0, n_chunks, body, 0, unroll=True)


# ----------------------------------------------------------------------------
# Wrapper helpers.
# ----------------------------------------------------------------------------
def _default_grid_steps():
    """v7x has 2 TensorCores per chip -> want >=2 parallel grid steps.
    v5e/v6e have 1 TC -> grid=1 avoids useless per-step overhead."""
    try:
        kind = jax.devices()[0].device_kind.lower()
    except Exception:
        return 1
    if any(tag in kind for tag in ("v7", "tpu7", "ironwood")):
        return 2
    return 1


def _pack_params(params, lb, ub):
    """Fold normalization into layer 1 and pack everything into (H_pad, 128)."""
    (w1, b1), (w2, b2), (w3, b3) = params
    w1 = jnp.asarray(w1, jnp.float32)
    w2 = jnp.asarray(w2, jnp.float32)
    w3 = jnp.asarray(w3, jnp.float32)
    b1 = jnp.asarray(b1, jnp.float32).reshape(-1)
    b2 = jnp.asarray(b2, jnp.float32).reshape(-1)
    b3 = jnp.asarray(b3, jnp.float32).reshape(-1)

    h1, in_dim = w1.shape
    h2 = w2.shape[0]
    assert in_dim == 2 and w2.shape[1] == h1 and w3.shape == (1, h2)

    # Fold (x - lb) / (ub - lb) into layer 1: exact algebraic identity.
    scale = 1.0 / (ub - lb)                              # (2,)
    w1f = w1 * scale[None, :]                            # (H1, 2)
    b1f = b1 - w1f @ lb                                  # (H1,)

    h_pad = max(8, pl.cdiv(max(h1, h2), 8) * 8)
    assert h_pad + 6 <= 128, "hidden width too large for packed layout"

    p = jnp.zeros((h_pad, 128), jnp.float32)
    p = p.at[:h2, :h1].set(w2)
    p = p.at[:h1, h_pad + 0].set(w1f[:, 0])
    p = p.at[:h1, h_pad + 1].set(w1f[:, 1])
    p = p.at[:h1, h_pad + 2].set(b1f)
    p = p.at[:h2, h_pad + 3].set(b2)
    p = p.at[:h2, h_pad + 4].set(w3.reshape(-1))
    p = p.at[0, h_pad + 5].set(b3[0])
    # Zero-padded rows/cols are exact no-ops through the whole network
    # (tanh(0)=0, zero weight rows contribute 0), so computing at H_pad is exact.
    return p, h_pad


# ----------------------------------------------------------------------------
# Wrapper: feature-major compute, chunked kernel, generation-aware grid.
# ----------------------------------------------------------------------------
def pinn_forward(x, lb, ub, params, *, lane_chunk=512, max_batch_tile=65536,
                 grid_steps=None):
    """PINN MLP forward (layers [2, H, H, 1]) with a Pallas TPU kernel.

    x      : (2, N) feature-major (preferred: no transpose copy) or (N, 2)
    lb, ub : (2,) float32 domain lower / upper bounds
    params : [(W1, b1), (W2, b2), (W3, b3)] in PyTorch layout (out, in)
    Returns (N, 1) float32, matching the PyTorch forward.
    """
    lb = jnp.asarray(lb, jnp.float32).reshape(-1)
    ub = jnp.asarray(ub, jnp.float32).reshape(-1)

    x = jnp.asarray(x, jnp.float32)
    assert x.ndim == 2
    if x.shape[0] == 2 and x.shape[1] != 2:
        xT = x                       # already feature-major: zero-copy path
    elif x.shape[1] == 2:
        xT = x.T                     # row-major convenience path (one copy)
    else:
        raise ValueError(f"expected (N, 2) or (2, N) input, got {x.shape}")
    n = xT.shape[1]

    packed, h_pad = _pack_params(params, lb, ub)

    # Lane chunk (bounds vreg live ranges inside the kernel).
    chunk = max(128, (int(lane_chunk) // 128) * 128)
    steps = int(grid_steps) if grid_steps is not None else _default_grid_steps()
    steps = max(1, steps)

    # Batch tile: aim for `steps` grid steps, multiple of `chunk`, capped.
    tile = pl.cdiv(n, steps * chunk) * chunk
    tile = min(tile, max(chunk, (int(max_batch_tile) // chunk) * chunk))
    grid = pl.cdiv(n, tile)          # ragged last block handled by Pallas masking
    n_chunks = tile // chunk

    kernel = functools.partial(pinn_forward_kernel, chunk=chunk,
                               n_chunks=n_chunks)

    grid_spec = pltpu.PrefetchScalarGridSpec(
        num_scalar_prefetch=0,
        grid=(grid,),
        in_specs=[
            pl.BlockSpec((2, tile), lambda i: (0, i)),          # x tile
            pl.BlockSpec((h_pad, 128), lambda i: (0, 0)),       # packed params
        ],
        out_specs=pl.BlockSpec((1, tile), lambda i: (0, i)),
    )

    out_t = pl.pallas_call(
        kernel,
        out_shape=jax.ShapeDtypeStruct((1, n), jnp.float32),
        grid_spec=grid_spec,
        compiler_params=pltpu.CompilerParams(
            dimension_semantics=("parallel",)),
    )(xT, packed)

    return out_t.T                   # (N, 1), matching the PyTorch forward


# ----------------------------------------------------------------------------
# Pure-JAX reference (mirrors the PyTorch forward exactly).
# ----------------------------------------------------------------------------
def pinn_forward_ref(x, lb, ub, params):
    lb = jnp.asarray(lb, jnp.float32).reshape(1, -1)
    ub = jnp.asarray(ub, jnp.float32).reshape(1, -1)
    a = (jnp.asarray(x, jnp.float32) - lb) / (ub - lb)
    for i, (w, b) in enumerate(params):
        z = a @ w.T + b.reshape(1, -1)
        a = jnp.tanh(z) if i < len(params) - 1 else z
    return a


def init_params(key, layers):
    """Xavier-normal weights (gain=1.0), zero biases — matching
    nn.init.xavier_normal_ / nn.init.zeros_ in the module (PyTorch layout)."""
    params = []
    for i in range(len(layers) - 1):
        key, sub = jax.random.split(key)
        fan_in, fan_out = layers[i], layers[i + 1]
        std = (2.0 / (fan_in + fan_out)) ** 0.5
        w = std * jax.random.normal(sub, (fan_out, fan_in), dtype=jnp.float32)
        b = jnp.zeros((fan_out,), dtype=jnp.float32)
        params.append((w, b))
    return params


if __name__ == "__main__":
    key = jax.random.PRNGKey(0)

    # Small PINN: layers = [2, 32, 32, 1]  (x, t) -> hidden -> hidden -> u
    layers = [2, 32, 32, 1]
    lb = jnp.array([-1.0, 0.0], dtype=jnp.float32)   # Burgers: x in [-1,1]
    ub = jnp.array([1.0, 1.0], dtype=jnp.float32)    #          t in [ 0,1]

    key, kp = jax.random.split(key)
    params = init_params(kp, layers)

    # --- Test 1: preferred feature-major input, divisible batch -------------
    N1 = 1024
    key, kx, kt = jax.random.split(key, 3)
    xs = jax.random.uniform(kx, (N1,), jnp.float32, -1.0, 1.0)
    ts = jax.random.uniform(kt, (N1,), jnp.float32, 0.0, 1.0)
    x_fm = jnp.stack([xs, ts], axis=0)               # (2, N) feature-major
    x_rm = jnp.stack([xs, ts], axis=1)               # (N, 2) row-major (ref)

    out1 = jax.block_until_ready(pinn_forward(x_fm, lb, ub, params))
    ref1 = pinn_forward_ref(x_rm, lb, ub, params)
    assert out1.shape == (N1, 1)
    err1 = float(jnp.max(jnp.abs(out1 - ref1)))
    assert jnp.allclose(out1, ref1, atol=1e-4, rtol=1e-4), \
        f"mismatch vs reference (feature-major path, max abs err = {err1})"

    # --- Test 2: row-major input, ragged last block, explicit 2-step grid ---
    N2 = 700
    key, kx2, kt2 = jax.random.split(key, 3)
    xs2 = jax.random.uniform(kx2, (N2,), jnp.float32, -1.0, 1.0)
    ts2 = jax.random.uniform(kt2, (N2,), jnp.float32, 0.0, 1.0)
    x_rm2 = jnp.stack([xs2, ts2], axis=1)            # (N, 2)

    out2 = jax.block_until_ready(
        pinn_forward(x_rm2, lb, ub, params, grid_steps=2))
    ref2 = pinn_forward_ref(x_rm2, lb, ub, params)
    assert out2.shape == (N2, 1)
    err2 = float(jnp.max(jnp.abs(out2 - ref2)))
    assert jnp.allclose(out2, ref2, atol=1e-4, rtol=1e-4), \
        f"mismatch vs reference (ragged/2-step path, max abs err = {err2})"

    # TODO(synk): loss_PDE's autograd.grad (u_x, u_t, u_xx) differentiates the
    # network; the right end-to-end win is fusing forward-mode tangent
    # propagation into this same kernel (and a custom_vjp for training), which
    # is outside this forward-only kernel.
    print("KERNEL_OK")
</pallas_src>

<mosaic_0001>
module attributes {stable_mosaic.version = 11 : i64} {
  func.func @pinn_forward_kernel(%arg0: i32, %arg1: memref<2x1024xf32, #tpu.memory_space<vmem>>, %arg2: memref<32x128xf32, #tpu.memory_space<vmem>>, %arg3: memref<1x1024xf32, #tpu.memory_space<vmem>>) attributes {dimension_semantics = [#tpu.dimension_semantics<parallel>], iteration_bounds = array<i64: 1>, scalar_prefetch = 0 : i64, scratch_operands = 0 : i64, tpu.core_type = #tpu.core_type<tc>, window_params = [{transform_indices = @transform_0, window_bounds = array<i64: 2, 1024>}, {pipeline_mode = #tpu.pipeline_mode<synchronous>, transform_indices = @transform_1, window_bounds = array<i64: 32, 128>}, {transform_indices = @transform_2, window_bounds = array<i64: 1, 1024>}]} {
    %c0 = arith.constant 0 : index
    %c0_0 = arith.constant 0 : index
    %0 = vector.load %arg2[%c0, %c0_0] : memref<32x128xf32, #tpu.memory_space<vmem>>, vector<32x128xf32>
    %1 = vector.extract_strided_slice %0 {offsets = [0, 0], sizes = [32, 32], strides = [1, 1]} : vector<32x128xf32> to vector<32x32xf32>
    %2 = vector.extract_strided_slice %0 {offsets = [0, 32], sizes = [32, 1], strides = [1, 1]} : vector<32x128xf32> to vector<32x1xf32>
    %3 = vector.extract_strided_slice %0 {offsets = [0, 33], sizes = [32, 1], strides = [1, 1]} : vector<32x128xf32> to vector<32x1xf32>
    %4 = vector.extract_strided_slice %0 {offsets = [0, 34], sizes = [32, 1], strides = [1, 1]} : vector<32x128xf32> to vector<32x1xf32>
    %5 = vector.extract_strided_slice %0 {offsets = [0, 35], sizes = [32, 1], strides = [1, 1]} : vector<32x128xf32> to vector<32x1xf32>
    %6 = vector.extract_strided_slice %0 {offsets = [0, 36], sizes = [32, 1], strides = [1, 1]} : vector<32x128xf32> to vector<32x1xf32>
    %7 = vector.extract_strided_slice %0 {offsets = [0, 37], sizes = [1, 1], strides = [1, 1]} : vector<32x128xf32> to vector<1x1xf32>
    %c0_i32 = arith.constant 0 : i32
    %c512_i32 = arith.constant 512 : i32
    %8 = arith.muli %c0_i32, %c512_i32 : i32
    %9 = tpu.assume_multiple %8, 512 : i32
    %c0_1 = arith.constant 0 : index
    %10 = arith.index_cast %9 : i32 to index
    %11 = vector.load %arg1[%c0_1, %10] : memref<2x1024xf32, #tpu.memory_space<vmem>>, vector<2x512xf32>
    %12 = vector.extract_strided_slice %11 {offsets = [0, 0], sizes = [1, 512], strides = [1, 1]} : vector<2x512xf32> to vector<1x512xf32>
    %13 = vector.broadcast %2 : vector<32x1xf32> to vector<32x512xf32>
    %14 = vector.broadcast %12 : vector<1x512xf32> to vector<32x512xf32>
    %15 = arith.mulf %13, %14 : vector<32x512xf32>
    %16 = vector.extract_strided_slice %11 {offsets = [1, 0], sizes = [1, 512], strides = [1, 1]} : vector<2x512xf32> to vector<1x512xf32>
    %17 = vector.broadcast %3 : vector<32x1xf32> to vector<32x512xf32>
    %18 = vector.broadcast %16 : vector<1x512xf32> to vector<32x512xf32>
    %19 = arith.mulf %17, %18 : vector<32x512xf32>
    %20 = arith.addf %15, %19 : vector<32x512xf32>
    %21 = vector.broadcast %4 : vector<32x1xf32> to vector<32x512xf32>
    %22 = arith.addf %20, %21 : vector<32x512xf32>
    %23 = math.tanh %22 : vector<32x512xf32>
    %cst = arith.constant dense<0.000000e+00> : vector<32x512xf32>
    %24 = tpu.matmul %1, %23, %cst {dimension_numbers = #tpu.dot_dimension_numbers<[1], [0], [0], [1], [0, 0, 1, 1], [], []>} : vector<32x32xf32>, vector<32x512xf32>, vector<32x512xf32> -> vector<32x512xf32>
    %25 = vector.broadcast %5 : vector<32x1xf32> to vector<32x512xf32>
    %26 = arith.addf %24, %25 : vector<32x512xf32>
    %27 = math.tanh %26 : vector<32x512xf32>
    %28 = vector.broadcast %6 : vector<32x1xf32> to vector<32x512xf32>
    %29 = arith.mulf %28, %27 : vector<32x512xf32>
    %cst_2 = arith.constant dense<0.000000e+00> : vector<512xf32>
    %30 = vector.multi_reduction <add>, %29, %cst_2 [0] : vector<32x512xf32> to vector<512xf32>
    %31 = vector.shape_cast %30 : vector<512xf32> to vector<1x512xf32>
    %32 = vector.broadcast %7 : vector<1x1xf32> to vector<1x512xf32>
    %33 = arith.addf %31, %32 : vector<1x512xf32>
    %c0_3 = arith.constant 0 : index
    %34 = arith.index_cast %9 : i32 to index
    %35 = vector.load %arg3[%c0_3, %34] : memref<1x1024xf32, #tpu.memory_space<vmem>>, vector<1x512xf32>
    tpu.vector_store %arg3[%c0_3, %34], %33 {strides = array<i32>} : memref<1x1024xf32, #tpu.memory_space<vmem>>, vector<1x512xf32>,
    %c1_i32 = arith.constant 1 : i32
    %c512_i32_4 = arith.constant 512 : i32
    %36 = arith.muli %c1_i32, %c512_i32_4 : i32
    %37 = tpu.assume_multiple %36, 512 : i32
    %c0_5 = arith.constant 0 : index
    %38 = arith.index_cast %37 : i32 to index
    %39 = vector.load %arg1[%c0_5, %38] : memref<2x1024xf32, #tpu.memory_space<vmem>>, vector<2x512xf32>
    %40 = vector.extract_strided_slice %39 {offsets = [0, 0], sizes = [1, 512], strides = [1, 1]} : vector<2x512xf32> to vector<1x512xf32>
    %41 = vector.broadcast %2 : vector<32x1xf32> to vector<32x512xf32>
    %42 = vector.broadcast %40 : vector<1x512xf32> to vector<32x512xf32>
    %43 = arith.mulf %41, %42 : vector<32x512xf32>
    %44 = vector.extract_strided_slice %39 {offsets = [1, 0], sizes = [1, 512], strides = [1, 1]} : vector<2x512xf32> to vector<1x512xf32>
    %45 = vector.broadcast %3 : vector<32x1xf32> to vector<32x512xf32>
    %46 = vector.broadcast %44 : vector<1x512xf32> to vector<32x512xf32>
    %47 = arith.mulf %45, %46 : vector<32x512xf32>
    %48 = arith.addf %43, %47 : vector<32x512xf32>
    %49 = vector.broadcast %4 : vector<32x1xf32> to vector<32x512xf32>
    %50 = arith.addf %48, %49 : vector<32x512xf32>
    %51 = math.tanh %50 : vector<32x512xf32>
    %cst_6 = arith.constant dense<0.000000e+00> : vector<32x512xf32>
    %52 = tpu.matmul %1, %51, %cst_6 {dimension_numbers = #tpu.dot_dimension_numbers<[1], [0], [0], [1], [0, 0, 1, 1], [], []>} : vector<32x32xf32>, vector<32x512xf32>, vector<32x512xf32> -> vector<32x512xf32>
    %53 = vector.broadcast %5 : vector<32x1xf32> to vector<32x512xf32>
    %54 = arith.addf %52, %53 : vector<32x512xf32>
    %55 = math.tanh %54 : vector<32x512xf32>
    %56 = vector.broadcast %6 : vector<32x1xf32> to vector<32x512xf32>
    %57 = arith.mulf %56, %55 : vector<32x512xf32>
    %cst_7 = arith.constant dense<0.000000e+00> : vector<512xf32>
    %58 = vector.multi_reduction <add>, %57, %cst_7 [0] : vector<32x512xf32> to vector<512xf32>
    %59 = vector.shape_cast %58 : vector<512xf32> to vector<1x512xf32>
    %60 = vector.broadcast %7 : vector<1x1xf32> to vector<1x512xf32>
    %61 = arith.addf %59, %60 : vector<1x512xf32>
    %c0_8 = arith.constant 0 : index
    %62 = arith.index_cast %37 : i32 to index
    %63 = vector.load %arg3[%c0_8, %62] : memref<1x1024xf32, #tpu.memory_space<vmem>>, vector<1x512xf32>
    tpu.vector_store %arg3[%c0_8, %62], %61 {strides = array<i32>} : memref<1x1024xf32, #tpu.memory_space<vmem>>, vector<1x512xf32>,
    %c2_i32 = arith.constant 2 : i32
    return
  }
  func.func @transform_0(%arg0: i32) -> (i32, i32) {
    %c0_i32 = arith.constant 0 : i32
    %c0_i32_0 = arith.constant 0 : i32
    return %c0_i32, %arg0 : i32, i32
  }
  func.func @transform_1(%arg0: i32) -> (i32, i32) {
    %c0_i32 = arith.constant 0 : i32
    %c0_i32_0 = arith.constant 0 : i32
    %c0_i32_1 = arith.constant 0 : i32
    return %c0_i32, %c0_i32_0 : i32, i32
  }
  func.func @transform_2(%arg0: i32) -> (i32, i32) {
    %c0_i32 = arith.constant 0 : i32
    %c0_i32_0 = arith.constant 0 : i32
    return %c0_i32, %arg0 : i32, i32
  }
}

</mosaic_0001>

<llo_original>
// kernel: tpu_custom_call.1
$region0: #{tpu_custom_call.1}
  #allocation0 [shape = 'u32[]', space=smem, size = 0x4, offset = 0x4, fixed_abs, tag = 'smem constant byte address 0x4 - core index']
  #allocation1 [shape = 'u32[72,128]{1,0:T(1,128)}', space=vmem, size = 0x9000, scoped, tag = 'internal scratch']
  %s0 = inlined_call_operand.hbm [shape: f32[2,1024], index: 0, kind: input, shape index: {}]
  %s1 = inlined_call_operand.hbm [shape: f32[32,128], index: 1, kind: input, shape index: {}]
  %s2 = inlined_call_operand.hbm [shape: f32[1,1024], index: 2, kind: output, shape index: {}]
  %s3 = sld [smem:[#allocation0]]
  $region26: #{tpu_custom_call.1} parent=0
    _
  %s5 = ssub.s32 1, %s3
  %s6 = scalar_select 0, %s5, %s3
  $region1: #{tpu_custom_call.1} parent=0
    #allocation2 [shape = 'u8[8192]{0}', space=vmem, size = 0x2000, scoped, tag = 'input window, operand 0, single buffered']
    #allocation3 [shape = 's32[1]{0}', space=sflag, size = 0x4, scoped, tag = 'scoped memory for tpu_custom_call.1']
    #allocation4 [shape = 's32[1]{0}', space=sflag, size = 0x4, scoped, tag = 'scoped memory for tpu_custom_call.1']
    #allocation5 [shape = 'u8[16384]{0}', space=vmem, size = 0x4000, scoped, tag = 'input window, operand 1, single buffered']
    #allocation6 [shape = 's32[1]{0}', space=sflag, size = 0x4, scoped, tag = 'scoped memory for tpu_custom_call.1']
    #allocation7 [shape = 'u8[4096]{0}', space=vmem, size = 0x1000, scoped, tag = 'output window, operand 0, single buffered']
    %7 = vsyncpa [#allocation3], 0
    %8 = vsyncpa [#allocation6], 0
    %9 = vsyncpa [#allocation4], 0
    // Predicated region
    $region2: #{tpu_custom_call.1} parent=1 // pred_check
      _
    $region3: #{tpu_custom_call.1} parent=1 // pred_check_branch
      %11 = sbr.rel (0) target = $region5
    $region4: #{tpu_custom_call.1} parent=1 // pred_region
      %13 = vsyncadd [#allocation3], 0
      %s15 = sshll.u32 %s0, 4
      %s16 = int_to_ptr.hbm [resolvable:$true] %s15
      %s17 = sshll.u32 [#allocation2], 4
      %s18 = int_to_ptr.vmem [resolvable:$true] %s17
      %20 = dma.hbm_to_vmem [thread:$0]  %s16, 256, %s18, [#allocation3]
    $region5: #{tpu_custom_call.1} parent=1 // pred_fallthru
      _
    // Predicated region
    $region6: #{tpu_custom_call.1} parent=1 // pred_check
      _
    $region7: #{tpu_custom_call.1} parent=1 // pred_check_branch
      %22 = sbr.rel (0) target = $region9
    $region8: #{tpu_custom_call.1} parent=1 // pred_region
      %24 = vsyncadd [#allocation6], 0
      %s25 = sshll.u32 %s1, 4
      %s26 = int_to_ptr.hbm [resolvable:$true] %s25
      %s27 = sshll.u32 [#allocation5], 4
      %s28 = int_to_ptr.vmem [resolvable:$true] %s27
      %33 = dma.hbm_to_vmem [thread:$0]  %s26, 512, %s28, [#allocation6], 128, 128, 8
    $region9: #{tpu_custom_call.1} parent=1 // pred_fallthru
      _
    // Predicated region
    $region10: #{tpu_custom_call.1} parent=1 // pred_check
      _
    $region11: #{tpu_custom_call.1} parent=1 // pred_check_branch
      %35 = sbr.rel (0) target = $region13
    $region12: #{tpu_custom_call.1} parent=1 // pred_region
      %37 = dma.done [#allocation3], 256
    $region13: #{tpu_custom_call.1} parent=1 // pred_fallthru
      _
    // Predicated region
    $region14: #{tpu_custom_call.1} parent=1 // pred_check
      _
    $region15: #{tpu_custom_call.1} parent=1 // pred_check_branch
      %39 = sbr.rel (0) target = $region17
    $region16: #{tpu_custom_call.1} parent=1 // pred_region
      %41 = dma.done [#allocation6], 512
    $region17: #{tpu_custom_call.1} parent=1 // pred_fallthru
      _
    %v42 = vld [vmem:[#allocation5] sm:$0xff]
    %v43 = vld [vmem:[#allocation5 + $0x8] sm:$0xff]
    %v44 = vld [vmem:[#allocation5 + $0x10] sm:$0xff]
    %v45 = vld [vmem:[#allocation5 + $0x18] sm:$0xff]
    %v46 = vld [vmem:[#allocation2] sm:$0xff]
    %48 = vset.pattern.permute.xlu0 32
    %49 = vperm.xlu0 %48, %v42
    %v50 = vpop.permute.xlu0 %49
    %53 = vset.pattern.permute.xlu0 32
    %54 = vperm.xlu0 %53, %v43
    %v55 = vpop.permute.xlu0 %54
    %58 = vset.pattern.permute.xlu0 32
    %59 = vperm.xlu0 %58, %v44
    %v60 = vpop.permute.xlu0 %59
    %63 = vset.pattern.permute.xlu0 32
    %64 = vperm.xlu0 %63, %v45
    %v65 = vpop.permute.xlu0 %64
    %v68 = vperm.slane %v46, 0
    %v69 = vperm.slane %v46, 2
    %v70 = vperm.slane %v46, 4
    %v71 = vperm.slane %v46, 6
    %v76 = vperm.slane %v68, 0
    %v77 = vperm.slane %v69, 0
    %v78 = vperm.slane %v70, 0
    %v79 = vperm.slane %v71, 0
    %v80 = vmul.f32 %v50, %v76
    %v81 = vmul.f32 %v50, %v77
    %v82 = vmul.f32 %v50, %v78
    %v83 = vmul.f32 %v50, %v79
    %v84 = vmul.f32 %v55, %v76
    %v85 = vmul.f32 %v55, %v77
    %v86 = vmul.f32 %v55, %v78
    %v87 = vmul.f32 %v55, %v79
    %v88 = vmul.f32 %v60, %v76
    %v89 = vmul.f32 %v60, %v77
    %v90 = vmul.f32 %v60, %v78
    %v91 = vmul.f32 %v60, %v79
    %v92 = vmul.f32 %v65, %v76
    %v93 = vmul.f32 %v65, %v77
    %v94 = vmul.f32 %v65, %v78
    %v95 = vmul.f32 %v65, %v79
    %96 = vset.pattern.permute.xlu0 33
    %97 = vperm.xlu0 %96, %v42
    %v98 = vpop.permute.xlu0 %97
    %100 = vset.pattern.permute.xlu0 33
    %101 = vperm.xlu0 %100, %v43
    %v102 = vpop.permute.xlu0 %101
    %104 = vset.pattern.permute.xlu0 33
    %105 = vperm.xlu0 %104, %v44
    %v106 = vpop.permute.xlu0 %105
    %108 = vset.pattern.permute.xlu0 33
    %109 = vperm.xlu0 %108, %v45
    %v110 = vpop.permute.xlu0 %109
    %v112 = vperm.slane %v46, 1
    %v113 = vperm.slane %v46, 3
    %v114 = vperm.slane %v46, 5
    %v115 = vperm.slane %v46, 7
    %v120 = vperm.slane %v112, 1
    %v121 = vperm.slane %v113, 1
    %v122 = vperm.slane %v114, 1
    %v123 = vperm.slane %v115, 1
    %v124 = vmul.f32 %v98, %v120
    %v125 = vmul.f32 %v98, %v121
    %v126 = vmul.f32 %v98, %v122
    %v127 = vmul.f32 %v98, %v123
    %v128 = vmul.f32 %v102, %v120
    %v129 = vmul.f32 %v102, %v121
    %v130 = vmul.f32 %v102, %v122
    %v131 = vmul.f32 %v102, %v123
    %v132 = vmul.f32 %v106, %v120
    %v133 = vmul.f32 %v106, %v121
    %v134 = vmul.f32 %v106, %v122
    %v135 = vmul.f32 %v106, %v123
    %v136 = vmul.f32 %v110, %v120
    %v137 = vmul.f32 %v110, %v121
    %v138 = vmul.f32 %v110, %v122
    %v139 = vmul.f32 %v110, %v123
    %v140 = vadd.f32 %v80, %v124
    %v141 = vadd.f32 %v81, %v125
    %v142 = vadd.f32 %v82, %v126
    %v143 = vadd.f32 %v83, %v127
    %v144 = vadd.f32 %v84, %v128
    %v145 = vadd.f32 %v85, %v129
    %v146 = vadd.f32 %v86, %v130
    %v147 = vadd.f32 %v87, %v131
    %v148 = vadd.f32 %v88, %v132
    %v149 = vadd.f32 %v89, %v133
    %v150 = vadd.f32 %v90, %v134
    %v151 = vadd.f32 %v91, %v135
    %v152 = vadd.f32 %v92, %v136
    %v153 = vadd.f32 %v93, %v137
    %v154 = vadd.f32 %v94, %v138
    %v155 = vadd.f32 %v95, %v139
    %156 = vset.pattern.permute.xlu0 34
    %157 = vperm.xlu0 %156, %v42
    %v158 = vpop.permute.xlu0 %157
    %160 = vset.pattern.permute.xlu0 34
    %161 = vperm.xlu0 %160, %v43
    %v162 = vpop.permute.xlu0 %161
    %164 = vset.pattern.permute.xlu0 34
    %165 = vperm.xlu0 %164, %v44
    %v166 = vpop.permute.xlu0 %165
    %168 = vset.pattern.permute.xlu0 34
    %169 = vperm.xlu0 %168, %v45
    %v170 = vpop.permute.xlu0 %169
    %v172 = vadd.f32 %v140, %v158
    %v173 = vadd.f32 %v141, %v158
    %v174 = vadd.f32 %v142, %v158
    %v175 = vadd.f32 %v143, %v158
    %v176 = vadd.f32 %v144, %v162
    %v177 = vadd.f32 %v145, %v162
    %v178 = vadd.f32 %v146, %v162
    %v179 = vadd.f32 %v147, %v162
    %v180 = vadd.f32 %v148, %v166
    %v181 = vadd.f32 %v149, %v166
    %v182 = vadd.f32 %v150, %v166
    %v183 = vadd.f32 %v151, %v166
    %v184 = vadd.f32 %v152, %v170
    %v185 = vadd.f32 %v153, %v170
    %v186 = vadd.f32 %v154, %v170
    %v187 = vadd.f32 %v155, %v170
    %v188 = vtanh.pop %v172
    %v189 = vtanh.pop %v173
    %v190 = vtanh.pop %v174
    %v191 = vtanh.pop %v175
    %v192 = vtanh.pop %v176
    %v193 = vtanh.pop %v177
    %v194 = vtanh.pop %v178
    %v195 = vtanh.pop %v179
    %v196 = vtanh.pop %v180
    %v197 = vtanh.pop %v181
    %v198 = vtanh.pop %v182
    %v199 = vtanh.pop %v183
    %v200 = vtanh.pop %v184
    %v201 = vtanh.pop %v185
    %v202 = vtanh.pop %v186
    %v203 = vtanh.pop %v187
    %204 = vset.pattern.permute.xlu0 35
    %205 = vperm.xlu0 %204, %v42
    %v206 = vpop.permute.xlu0 %205
    %208 = vset.pattern.permute.xlu0 35
    %209 = vperm.xlu0 %208, %v43
    %v210 = vpop.permute.xlu0 %209
    %212 = vset.pattern.permute.xlu0 35
    %213 = vperm.xlu0 %212, %v44
    %v214 = vpop.permute.xlu0 %213
    %216 = vset.pattern.permute.xlu0 35
    %217 = vperm.xlu0 %216, %v45
    %v218 = vpop.permute.xlu0 %217
    %vm220 = vcmask 261120
    %v221 = vsel %vm220, %v42, 0
    %v223 = vsel %vm220, %v43, 0
    %v225 = vsel %vm220, %v44, 0
    %v227 = vsel %vm220, %v45, 0
    %229 = vmatpush.msra.mxu0 0.0
    %230 = vmatpush.msra.mxu0 0.0
    %231 = vmatpush.msra.mxu0 0.0
    %232 = vmatpush.msra.mxu0 0.0
    %233 = vmatpush.msra.mxu0 0.0
    %234 = vmatpush.msra.mxu0 0.0
    %235 = vmatpush.msra.mxu0 0.0
    %236 = vmatpush.msra.mxu0 0.0
    %237 = vmatpush.msra.mxu0 0.0
    %238 = vmatpush.msra.mxu0 0.0
    %239 = vmatpush.msra.mxu0 0.0
    %240 = vmatpush.msra.mxu0 0.0
    %241 = vmatpush.msra.mxu0 %v200
    %242 = vmatpush.msra.mxu0 %v196
    %243 = vmatpush.msra.mxu0 %v192
    %244 = vmatpush.msra.mxu0 %v188
    %245 = vmatmul.f32.gmra.mxu0 %v221
    %v246 = vpop.f32.mrf.mxu0
    %v247 = vadd.f32 %v206, %v246
    %248 = vmatmul.f32.gmra.mxu0 %v223
    %v249 = vpop.f32.mrf.mxu0
    %v250 = vadd.f32 %v210, %v249
    %251 = vmatmul.f32.gmra.mxu0 %v225
    %v252 = vpop.f32.mrf.mxu0
    %v253 = vadd.f32 %v214, %v252
    %254 = vmatmul.f32.gmra.mxu0 %v227
    %v255 = vpop.f32.mrf.mxu0
    %v256 = vadd.f32 %v218, %v255
    %257 = vdwg.mxu0
    %258 = vmatpush.msra.mxu0 0.0
    %259 = vmatpush.msra.mxu0 0.0
    %260 = vmatpush.msra.mxu0 0.0
    %261 = vmatpush.msra.mxu0 0.0
    %262 = vmatpush.msra.mxu0 0.0
    %263 = vmatpush.msra.mxu0 0.0
    %264 = vmatpush.msra.mxu0 0.0
    %265 = vmatpush.msra.mxu0 0.0
    %266 = vmatpush.msra.mxu0 0.0
    %267 = vmatpush.msra.mxu0 0.0
    %268 = vmatpush.msra.mxu0 0.0
    %269 = vmatpush.msra.mxu0 0.0
    %270 = vmatpush.msra.mxu0 %v201
    %271 = vmatpush.msra.mxu0 %v197
    %272 = vmatpush.msra.mxu0 %v193
    %273 = vmatpush.msra.mxu0 %v189
    %274 = vmatmul.f32.gmra.mxu0 %v221
    %v275 = vpop.f32.mrf.mxu0
    %v276 = vadd.f32 %v206, %v275
    %277 = vmatmul.f32.gmra.mxu0 %v223
    %v278 = vpop.f32.mrf.mxu0
    %v279 = vadd.f32 %v210, %v278
    %280 = vmatmul.f32.gmra.mxu0 %v225
    %v281 = vpop.f32.mrf.mxu0
    %v282 = vadd.f32 %v214, %v281
    %283 = vmatmul.f32.gmra.mxu0 %v227
    %v284 = vpop.f32.mrf.mxu0
    %v285 = vadd.f32 %v218, %v284
    %286 = vdwg.mxu0
    %287 = vmatpush.msra.mxu0 0.0
    %288 = vmatpush.msra.mxu0 0.0
    %289 = vmatpush.msra.mxu0 0.0
    %290 = vmatpush.msra.mxu0 0.0
    %291 = vmatpush.msra.mxu0 0.0
    %292 = vmatpush.msra.mxu0 0.0
    %293 = vmatpush.msra.mxu0 0.0
    %294 = vmatpush.msra.mxu0 0.0
    %295 = vmatpush.msra.mxu0 0.0
    %296 = vmatpush.msra.mxu0 0.0
    %297 = vmatpush.msra.mxu0 0.0
    %298 = vmatpush.msra.mxu0 0.0
    %299 = vmatpush.msra.mxu0 %v202
    %300 = vmatpush.msra.mxu0 %v198
    %301 = vmatpush.msra.mxu0 %v194
    %302 = vmatpush.msra.mxu0 %v190
    %303 = vmatmul.f32.gmra.mxu0 %v221
    %v304 = vpop.f32.mrf.mxu0
    %v305 = vadd.f32 %v206, %v304
    %306 = vmatmul.f32.gmra.mxu0 %v223
    %v307 = vpop.f32.mrf.mxu0
    %v308 = vadd.f32 %v210, %v307
    %309 = vmatmul.f32.gmra.mxu0 %v225
    %v310 = vpop.f32.mrf.mxu0
    %v311 = vadd.f32 %v214, %v310
    %312 = vmatmul.f32.gmra.mxu0 %v227
    %v313 = vpop.f32.mrf.mxu0
    %v314 = vadd.f32 %v218, %v313
    %315 = vdwg.mxu0
    %316 = vmatpush.msra.mxu0 0.0
    %317 = vmatpush.msra.mxu0 0.0
    %318 = vmatpush.msra.mxu0 0.0
    %319 = vmatpush.msra.mxu0 0.0
    %320 = vmatpush.msra.mxu0 0.0
    %321 = vmatpush.msra.mxu0 0.0
    %322 = vmatpush.msra.mxu0 0.0
    %323 = vmatpush.msra.mxu0 0.0
    %324 = vmatpush.msra.mxu0 0.0
    %325 = vmatpush.msra.mxu0 0.0
    %326 = vmatpush.msra.mxu0 0.0
    %327 = vmatpush.msra.mxu0 0.0
    %328 = vmatpush.msra.mxu0 %v203
    %329 = vmatpush.msra.mxu0 %v199
    %330 = vmatpush.msra.mxu0 %v195
    %331 = vmatpush.msra.mxu0 %v191
    %332 = vmatmul.f32.gmra.mxu0 %v221
    %v333 = vpop.f32.mrf.mxu0
    %v334 = vadd.f32 %v206, %v333
    %335 = vmatmul.f32.gmra.mxu0 %v223
    %v336 = vpop.f32.mrf.mxu0
    %v337 = vadd.f32 %v210, %v336
    %338 = vmatmul.f32.gmra.mxu0 %v225
    %v339 = vpop.f32.mrf.mxu0
    %v340 = vadd.f32 %v214, %v339
    %341 = vmatmul.f32.gmra.mxu0 %v227
    %v342 = vpop.f32.mrf.mxu0
    %v343 = vadd.f32 %v218, %v342
    %344 = vdwg.mxu0
    %v345 = vtanh.pop %v247
    %v346 = vtanh.pop %v276
    %v347 = vtanh.pop %v305
    %v348 = vtanh.pop %v334
    %v349 = vtanh.pop %v250
    %v350 = vtanh.pop %v279
    %v351 = vtanh.pop %v308
    %v352 = vtanh.pop %v337
    %v353 = vtanh.pop %v253
    %v354 = vtanh.pop %v282
    %v355 = vtanh.pop %v311
    %v356 = vtanh.pop %v340
    %v357 = vtanh.pop %v256
    %v358 = vtanh.pop %v285
    %v359 = vtanh.pop %v314
    %v360 = vtanh.pop %v343
    %361 = vset.pattern.permute.xlu0 36
    %362 = vperm.xlu0 %361, %v42
    %v363 = vpop.permute.xlu0 %362
    %365 = vset.pattern.permute.xlu0 36
    %366 = vperm.xlu0 %365, %v43
    %v367 = vpop.permute.xlu0 %366
    %369 = vset.pattern.permute.xlu0 36
    %370 = vperm.xlu0 %369, %v44
    %v371 = vpop.permute.xlu0 %370
    %373 = vset.pattern.permute.xlu0 36
    %374 = vperm.xlu0 %373, %v45
    %v375 = vpop.permute.xlu0 %374
    %v377 = vmul.f32 %v363, %v345
    %v378 = vmul.f32 %v363, %v346
    %v379 = vmul.f32 %v363, %v347
    %v380 = vmul.f32 %v363, %v348
    %v381 = vmul.f32 %v367, %v349
    %v382 = vmul.f32 %v367, %v350
    %v383 = vmul.f32 %v367, %v351
    %v384 = vmul.f32 %v367, %v352
    %v385 = vmul.f32 %v371, %v353
    %v386 = vmul.f32 %v371, %v354
    %v387 = vmul.f32 %v371, %v355
    %v388 = vmul.f32 %v371, %v356
    %v389 = vmul.f32 %v375, %v357
    %v390 = vmul.f32 %v375, %v358
    %v391 = vmul.f32 %v375, %v359
    %v392 = vmul.f32 %v375, %v360
    %v393 = vadd.f32 %v377, %v381
    %v394 = vadd.f32 %v393, %v385
    %v395 = vadd.f32 %v394, %v389
    %v396 = vrot.slane %v395, 4
    %v397 = vadd.f32 %v395, %v396
    %v398 = vrot.slane %v397, 2
    %v399 = vadd.f32 %v397, %v398
    %v400 = vrot.slane %v399, 1
    %v401 = vadd.f32 %v399, %v400
    %v402 = vadd.f32 %v378, %v382
    %v403 = vadd.f32 %v402, %v386
    %v404 = vadd.f32 %v403, %v390
    %v405 = vrot.slane %v404, 4
    %v406 = vadd.f32 %v404, %v405
    %v407 = vrot.slane %v406, 2
    %v408 = vadd.f32 %v406, %v407
    %v409 = vrot.slane %v408, 1
    %v410 = vadd.f32 %v408, %v409
    %v411 = vadd.f32 %v379, %v383
    %v412 = vadd.f32 %v411, %v387
    %v413 = vadd.f32 %v412, %v391
    %v414 = vrot.slane %v413, 4
    %v415 = vadd.f32 %v413, %v414
    %v416 = vrot.slane %v415, 2
    %v417 = vadd.f32 %v415, %v416
    %v418 = vrot.slane %v417, 1
    %v419 = vadd.f32 %v417, %v418
    %v420 = vadd.f32 %v380, %v384
    %v421 = vadd.f32 %v420, %v388
    %v422 = vadd.f32 %v421, %v392
    %v423 = vrot.slane %v422, 4
    %v424 = vadd.f32 %v422, %v423
    %v425 = vrot.slane %v424, 2
    %v426 = vadd.f32 %v424, %v425
    %v427 = vrot.slane %v426, 1
    %v428 = vadd.f32 %v426, %v427
    %429 = vset.pattern.permute.xlu0 37
    %430 = vperm.xlu0 %429, %v42
    %v431 = vpop.permute.xlu0 %430
    %v433 = vadd.f32 %v401, %v431
    %v434 = vadd.f32 %v410, %v431
    %v435 = vadd.f32 %v419, %v431
    %v436 = vadd.f32 %v428, %v431
    %v441 = vrot.slane %v434, 7
    %v442 = vrot.slane %v435, 6
    %v443 = vrot.slane %v436, 5
    %vm444 = vcmask 1040384
    %v445 = vsel %vm444, %v433, %v441
    %vm446 = vcmask 1042434
    %v447 = vsel %vm446, %v442, %v443
    %vm448 = vcmask 1041408
    %v449 = vsel %vm448, %v445, %v447
    %v451 = vlaneseq
    %vm452 = vcmp.ge.s32.totalorder %v451, 0
    %vm453 = vcmp.lt.s32.totalorder %v451, 512
    %vm454 = vmand %vm452, %vm453
    %455 = vst.msk [vmem:[#allocation7] sm:$0xf] %vm454, %v449
    %s456 = scalar_lea.vmem [#allocation2], 8
    %v457 = vld [vmem:[%s456] sm:$0xff]
    %v459 = vperm.slane %v457, 0
    %v460 = vperm.slane %v457, 2
    %v461 = vperm.slane %v457, 4
    %v462 = vperm.slane %v457, 6
    %v467 = vperm.slane %v459, 0
    %v468 = vperm.slane %v460, 0
    %v469 = vperm.slane %v461, 0
    %v470 = vperm.slane %v462, 0
    %v471 = vmul.f32 %v50, %v467
    %v472 = vmul.f32 %v50, %v468
    %v473 = vmul.f32 %v50, %v469
    %v474 = vmul.f32 %v50, %v470
    %v475 = vmul.f32 %v55, %v467
    %v476 = vmul.f32 %v55, %v468
    %v477 = vmul.f32 %v55, %v469
    %v478 = vmul.f32 %v55, %v470
    %v479 = vmul.f32 %v60, %v467
    %v480 = vmul.f32 %v60, %v468
    %v481 = vmul.f32 %v60, %v469
    %v482 = vmul.f32 %v60, %v470
    %v483 = vmul.f32 %v65, %v467
    %v484 = vmul.f32 %v65, %v468
    %v485 = vmul.f32 %v65, %v469
    %v486 = vmul.f32 %v65, %v470
    %v487 = vperm.slane %v457, 1
    %v488 = vperm.slane %v457, 3
    %v489 = vperm.slane %v457, 5
    %v490 = vperm.slane %v457, 7
    %v495 = vperm.slane %v487, 1
    %v496 = vperm.slane %v488, 1
    %v497 = vperm.slane %v489, 1
    %v498 = vperm.slane %v490, 1
    %v499 = vmul.f32 %v98, %v495
    %v500 = vmul.f32 %v98, %v496
    %v501 = vmul.f32 %v98, %v497
    %v502 = vmul.f32 %v98, %v498
    %v503 = vmul.f32 %v102, %v495
    %v504 = vmul.f32 %v102, %v496
    %v505 = vmul.f32 %v102, %v497
    %v506 = vmul.f32 %v102, %v498
    %v507 = vmul.f32 %v106, %v495
    %v508 = vmul.f32 %v106, %v496
    %v509 = vmul.f32 %v106, %v497
    %v510 = vmul.f32 %v106, %v498
    %v511 = vmul.f32 %v110, %v495
    %v512 = vmul.f32 %v110, %v496
    %v513 = vmul.f32 %v110, %v497
    %v514 = vmul.f32 %v110, %v498
    %v515 = vadd.f32 %v471, %v499
    %v516 = vadd.f32 %v472, %v500
    %v517 = vadd.f32 %v473, %v501
    %v518 = vadd.f32 %v474, %v502
    %v519 = vadd.f32 %v475, %v503
    %v520 = vadd.f32 %v476, %v504
    %v521 = vadd.f32 %v477, %v505
    %v522 = vadd.f32 %v478, %v506
    %v523 = vadd.f32 %v479, %v507
    %v524 = vadd.f32 %v480, %v508
    %v525 = vadd.f32 %v481, %v509
    %v526 = vadd.f32 %v482, %v510
    %v527 = vadd.f32 %v483, %v511
    %v528 = vadd.f32 %v484, %v512
    %v529 = vadd.f32 %v485, %v513
    %v530 = vadd.f32 %v486, %v514
    %v531 = vadd.f32 %v515, %v158
    %v532 = vadd.f32 %v516, %v158
    %v533 = vadd.f32 %v517, %v158
    %v534 = vadd.f32 %v518, %v158
    %v535 = vadd.f32 %v519, %v162
    %v536 = vadd.f32 %v520, %v162
    %v537 = vadd.f32 %v521, %v162
    %v538 = vadd.f32 %v522, %v162
    %v539 = vadd.f32 %v523, %v166
    %v540 = vadd.f32 %v524, %v166
    %v541 = vadd.f32 %v525, %v166
    %v542 = vadd.f32 %v526, %v166
    %v543 = vadd.f32 %v527, %v170
    %v544 = vadd.f32 %v528, %v170
    %v545 = vadd.f32 %v529, %v170
    %v546 = vadd.f32 %v530, %v170
    %v547 = vtanh.pop %v531
    %v548 = vtanh.pop %v532
    %v549 = vtanh.pop %v533
    %v550 = vtanh.pop %v534
    %v551 = vtanh.pop %v535
    %v552 = vtanh.pop %v536
    %v553 = vtanh.pop %v537
    %v554 = vtanh.pop %v538
    %v555 = vtanh.pop %v539
    %v556 = vtanh.pop %v540
    %v557 = vtanh.pop %v541
    %v558 = vtanh.pop %v542
    %v559 = vtanh.pop %v543
    %v560 = vtanh.pop %v544
    %v561 = vtanh.pop %v545
    %v562 = vtanh.pop %v546
    %563 = vmatpush.msra.mxu0 0.0
    %564 = vmatpush.msra.mxu0 0.0
    %565 = vmatpush.msra.mxu0 0.0
    %566 = vmatpush.msra.mxu0 0.0
    %567 = vmatpush.msra.mxu0 0.0
    %568 = vmatpush.msra.mxu0 0.0
    %569 = vmatpush.msra.mxu0 0.0
    %570 = vmatpush.msra.mxu0 0.0
    %571 = vmatpush.msra.mxu0 0.0
    %572 = vmatpush.msra.mxu0 0.0
    %573 = vmatpush.msra.mxu0 0.0
    %574 = vmatpush.msra.mxu0 0.0
    %575 = vmatpush.msra.mxu0 %v559
    %576 = vmatpush.msra.mxu0 %v555
    %577 = vmatpush.msra.mxu0 %v551
    %578 = vmatpush.msra.mxu0 %v547
    %579 = vmatmul.f32.gmra.mxu0 %v221
    %v580 = vpop.f32.mrf.mxu0
    %v581 = vadd.f32 %v206, %v580
    %582 = vmatmul.f32.gmra.mxu0 %v223
    %v583 = vpop.f32.mrf.mxu0
    %v584 = vadd.f32 %v210, %v583
    %585 = vmatmul.f32.gmra.mxu0 %v225
    %v586 = vpop.f32.mrf.mxu0
    %v587 = vadd.f32 %v214, %v586
    %588 = vmatmul.f32.gmra.mxu0 %v227
    %v589 = vpop.f32.mrf.mxu0
    %v590 = vadd.f32 %v218, %v589
    %591 = vdwg.mxu0
    %592 = vmatpush.msra.mxu0 0.0
    %593 = vmatpush.msra.mxu0 0.0
    %594 = vmatpush.msra.mxu0 0.0
    %595 = vmatpush.msra.mxu0 0.0
    %596 = vmatpush.msra.mxu0 0.0
    %597 = vmatpush.msra.mxu0 0.0
    %598 = vmatpush.msra.mxu0 0.0
    %599 = vmatpush.msra.mxu0 0.0
    %600 = vmatpush.msra.mxu0 0.0
    %601 = vmatpush.msra.mxu0 0.0
    %602 = vmatpush.msra.mxu0 0.0
    %603 = vmatpush.msra.mxu0 0.0
    %604 = vmatpush.msra.mxu0 %v560
    %605 = vmatpush.msra.mxu0 %v556
    %606 = vmatpush.msra.mxu0 %v552
    %607 = vmatpush.msra.mxu0 %v548
    %608 = vmatmul.f32.gmra.mxu0 %v221
    %v609 = vpop.f32.mrf.mxu0
    %v610 = vadd.f32 %v206, %v609
    %611 = vmatmul.f32.gmra.mxu0 %v223
    %v612 = vpop.f32.mrf.mxu0
    %v613 = vadd.f32 %v210, %v612
    %614 = vmatmul.f32.gmra.mxu0 %v225
    %v615 = vpop.f32.mrf.mxu0
    %v616 = vadd.f32 %v214, %v615
    %617 = vmatmul.f32.gmra.mxu0 %v227
    %v618 = vpop.f32.mrf.mxu0
    %v619 = vadd.f32 %v218, %v618
    %620 = vdwg.mxu0
    %621 = vmatpush.msra.mxu0 0.0
    %622 = vmatpush.msra.mxu0 0.0
    %623 = vmatpush.msra.mxu0 0.0
    %624 = vmatpush.msra.mxu0 0.0
    %625 = vmatpush.msra.mxu0 0.0
    %626 = vmatpush.msra.mxu0 0.0
    %627 = vmatpush.msra.mxu0 0.0
    %628 = vmatpush.msra.mxu0 0.0
    %629 = vmatpush.msra.mxu0 0.0
    %630 = vmatpush.msra.mxu0 0.0
    %631 = vmatpush.msra.mxu0 0.0
    %632 = vmatpush.msra.mxu0 0.0
    %633 = vmatpush.msra.mxu0 %v561
    %634 = vmatpush.msra.mxu0 %v557
    %635 = vmatpush.msra.mxu0 %v553
    %636 = vmatpush.msra.mxu0 %v549
    %637 = vmatmul.f32.gmra.mxu0 %v221
    %v638 = vpop.f32.mrf.mxu0
    %v639 = vadd.f32 %v206, %v638
    %640 = vmatmul.f32.gmra.mxu0 %v223
    %v641 = vpop.f32.mrf.mxu0
    %v642 = vadd.f32 %v210, %v641
    %643 = vmatmul.f32.gmra.mxu0 %v225
    %v644 = vpop.f32.mrf.mxu0
    %v645 = vadd.f32 %v214, %v644
    %646 = vmatmul.f32.gmra.mxu0 %v227
    %v647 = vpop.f32.mrf.mxu0
    %v648 = vadd.f32 %v218, %v647
    %649 = vdwg.mxu0
    %650 = vmatpush.msra.mxu0 0.0
    %651 = vmatpush.msra.mxu0 0.0
    %652 = vmatpush.msra.mxu0 0.0
    %653 = vmatpush.msra.mxu0 0.0
    %654 = vmatpush.msra.mxu0 0.0
    %655 = vmatpush.msra.mxu0 0.0
    %656 = vmatpush.msra.mxu0 0.0
    %657 = vmatpush.msra.mxu0 0.0
    %658 = vmatpush.msra.mxu0 0.0
    %659 = vmatpush.msra.mxu0 0.0
    %660 = vmatpush.msra.mxu0 0.0
    %661 = vmatpush.msra.mxu0 0.0
    %662 = vmatpush.msra.mxu0 %v562
    %663 = vmatpush.msra.mxu0 %v558
    %664 = vmatpush.msra.mxu0 %v554
    %665 = vmatpush.msra.mxu0 %v550
    %666 = vmatmul.f32.gmra.mxu0 %v221
    %v667 = vpop.f32.mrf.mxu0
    %v668 = vadd.f32 %v206, %v667
    %669 = vmatmul.f32.gmra.mxu0 %v223
    %v670 = vpop.f32.mrf.mxu0
    %v671 = vadd.f32 %v210, %v670
    %672 = vmatmul.f32.gmra.mxu0 %v225
    %v673 = vpop.f32.mrf.mxu0
    %v674 = vadd.f32 %v214, %v673
    %675 = vmatmul.f32.gmra.mxu0 %v227
    %v676 = vpop.f32.mrf.mxu0
    %v677 = vadd.f32 %v218, %v676
    %678 = vdwg.mxu0
    %v679 = vtanh.pop %v581
    %v680 = vtanh.pop %v610
    %v681 = vtanh.pop %v639
    %v682 = vtanh.pop %v668
    %v683 = vtanh.pop %v584
    %v684 = vtanh.pop %v613
    %v685 = vtanh.pop %v642
    %v686 = vtanh.pop %v671
    %v687 = vtanh.pop %v587
    %v688 = vtanh.pop %v616
    %v689 = vtanh.pop %v645
    %v690 = vtanh.pop %v674
    %v691 = vtanh.pop %v590
    %v692 = vtanh.pop %v619
    %v693 = vtanh.pop %v648
    %v694 = vtanh.pop %v677
    %v695 = vmul.f32 %v363, %v679
    %v696 = vmul.f32 %v363, %v680
    %v697 = vmul.f32 %v363, %v681
    %v698 = vmul.f32 %v363, %v682
    %v699 = vmul.f32 %v367, %v683
    %v700 = vmul.f32 %v367, %v684
    %v701 = vmul.f32 %v367, %v685
    %v702 = vmul.f32 %v367, %v686
    %v703 = vmul.f32 %v371, %v687
    %v704 = vmul.f32 %v371, %v688
    %v705 = vmul.f32 %v371, %v689
    %v706 = vmul.f32 %v371, %v690
    %v707 = vmul.f32 %v375, %v691
    %v708 = vmul.f32 %v375, %v692
    %v709 = vmul.f32 %v375, %v693
    %v710 = vmul.f32 %v375, %v694
    %v711 = vadd.f32 %v695, %v699
    %v712 = vadd.f32 %v711, %v703
    %v713 = vadd.f32 %v712, %v707
    %v714 = vrot.slane %v713, 4
    %v715 = vadd.f32 %v713, %v714
    %v716 = vrot.slane %v715, 2
    %v717 = vadd.f32 %v715, %v716
    %v718 = vrot.slane %v717, 1
    %v719 = vadd.f32 %v717, %v718
    %v720 = vadd.f32 %v696, %v700
    %v721 = vadd.f32 %v720, %v704
    %v722 = vadd.f32 %v721, %v708
    %v723 = vrot.slane %v722, 4
    %v724 = vadd.f32 %v722, %v723
    %v725 = vrot.slane %v724, 2
    %v726 = vadd.f32 %v724, %v725
    %v727 = vrot.slane %v726, 1
    %v728 = vadd.f32 %v726, %v727
    %v729 = vadd.f32 %v697, %v701
    %v730 = vadd.f32 %v729, %v705
    %v731 = vadd.f32 %v730, %v709
    %v732 = vrot.slane %v731, 4
    %v733 = vadd.f32 %v731, %v732
    %v734 = vrot.slane %v733, 2
    %v735 = vadd.f32 %v733, %v734
    %v736 = vrot.slane %v735, 1
    %v737 = vadd.f32 %v735, %v736
    %v738 = vadd.f32 %v698, %v702
    %v739 = vadd.f32 %v738, %v706
    %v740 = vadd.f32 %v739, %v710
    %v741 = vrot.slane %v740, 4
    %v742 = vadd.f32 %v740, %v741
    %v743 = vrot.slane %v742, 2
    %v744 = vadd.f32 %v742, %v743
    %v745 = vrot.slane %v744, 1
    %v746 = vadd.f32 %v744, %v745
    %v747 = vadd.f32 %v719, %v431
    %v748 = vadd.f32 %v728, %v431
    %v749 = vadd.f32 %v737, %v431
    %v750 = vadd.f32 %v746, %v431
    %v755 = vrot.slane %v748, 7
    %v756 = vrot.slane %v749, 6
    %v757 = vrot.slane %v750, 5
    %v758 = vsel %vm444, %v747, %v755
    %v759 = vsel %vm446, %v756, %v757
    %v760 = vsel %vm448, %v758, %v759
    %s762 = scalar_lea.vmem [#allocation7], 4
    %763 = vst.msk [vmem:[%s762] sm:$0xf] %vm454, %v760
    // Predicated region
    $region18: #{tpu_custom_call.1} parent=1 // pred_check
      _
    $region19: #{tpu_custom_call.1} parent=1 // pred_check_branch
      %765 = sbr.rel (0) target = $region21
    $region20: #{tpu_custom_call.1} parent=1 // pred_region
      %767 = vsyncadd [#allocation4], 0
      %s769 = sshll.u32 [#allocation7], 4
      %s770 = int_to_ptr.vmem [resolvable:$true] %s769
      %s771 = sshll.u32 %s2, 4
      %s772 = int_to_ptr.hbm [resolvable:$true] %s771
      %774 = dma.vmem_to_hbm [thread:$0]  %s770, 128, %s772, [#allocation4]
    $region21: #{tpu_custom_call.1} parent=1 // pred_fallthru
      _
    // Predicated region
    $region22: #{tpu_custom_call.1} parent=1 // pred_check
      _
    $region23: #{tpu_custom_call.1} parent=1 // pred_check_branch
      %776 = sbr.rel (0) target = $region25
    $region24: #{tpu_custom_call.1} parent=1 // pred_region
      %778 = dma.done [#allocation4], 128
    $region25: #{tpu_custom_call.1} parent=1 // pred_fallthru
      _
    %779 = vsyncpa [#allocation3], 1
    %780 = vsyncpa [#allocation6], 1
    %781 = vsyncpa [#allocation4], 1

</llo_original>
